<compile_context>
chip_gen: v7x
topology: tpu7x:2x2x1
jax: 0.10.0
libtpu: 0.0.40
codegen_flags: <defaults>
</compile_context>

<pallas_src>
import jax
import jax.numpy as jnp
from jax.experimental import pallas as pl
from jax.experimental.pallas import tpu as pltpu

UNIFORM_RANGE = 0.3
_LANE = 128
# Per-step x-block byte target (see header): big enough to amortize grid-step
# overhead on v7x's 3.2 TB/s HBM, small enough for v5e's 16 MiB scoped default.
_TARGET_BLOCK_BYTES = 2 * 1024 * 1024


def _round_up(a, b):
    return (a + b - 1) // b * b


def _feature_noise_kernel(scale_ref, x_ref, o_ref):
    # scale holds (1 + noise); out = x * (1 + noise) == x * noise + x.
    # scale block: (tile_rows, 128); x/out blocks: (Bt, tile_rows, 128).
    o_ref[...] = (x_ref[...] * scale_ref[...][None, :, :]).astype(o_ref.dtype)


def _apply_feature_scale(x, scale):
    """x: (N, *feat); scale: feat-shaped array holding 1 + noise."""
    N = x.shape[0]
    L = 1
    for d in x.shape[1:]:
        L *= d

    dtype_bytes = jnp.dtype(x.dtype).itemsize
    sub = {4: 8, 2: 16, 1: 32}.get(dtype_bytes, 8)

    # Match scale dtype to x: halves scale DMA/VMEM traffic and avoids per-vreg
    # casts for bf16 x.  (Noise quantizes to x's mantissa -- acceptable for a
    # noise regularizer.)
    if jnp.issubdtype(x.dtype, jnp.floating):
        scale = scale.astype(x.dtype)
    else:
        scale = scale.astype(jnp.float32)

    # Lane-dense layout: flatten feature dims into (rows, 128).
    rows = pl.cdiv(L, _LANE)
    rows_sub = _round_up(rows, sub)

    # Adaptive feature tiling: pick the minimal tile count whose block fits the
    # per-step target, then split rows evenly so padding waste is at most a few
    # rows of sublane rounding (not up to a whole max-size tile).
    max_tile_rows = max(sub, (_TARGET_BLOCK_BYTES // (_LANE * dtype_bytes)) // sub * sub)
    n_tiles = pl.cdiv(rows_sub, max_tile_rows)
    tile_rows = _round_up(pl.cdiv(rows_sub, n_tiles), sub)
    rows_pad = tile_rows * n_tiles
    L_pad = rows_pad * _LANE

    # Small feature slabs: widen the block over the batch axis so each grid
    # step still moves ~_TARGET_BLOCK_BYTES.  Bt = largest divisor of N that
    # fits the target (divisor -> exact tiling, no batch padding).
    bt_cap = max(1, (_TARGET_BLOCK_BYTES // (_LANE * dtype_bytes)) // tile_rows)
    bt_cap = min(bt_cap, N)
    Bt = max(d for d in range(1, bt_cap + 1) if N % d == 0)

    x_flat = x.reshape(N, L)
    s_flat = scale.reshape(L)
    if L_pad != L:
        # TODO(synk): when L % 128 != 0 this pad (and the slice below) costs an
        # extra HBM pass over x/out around the custom call; callers that can
        # keep the padded (rows_pad, 128) layout end-to-end should do so.
        x_flat = jnp.pad(x_flat, ((0, 0), (0, L_pad - L)))
        s_flat = jnp.pad(s_flat, ((0, L_pad - L),), constant_values=1.0)

    x3 = x_flat.reshape(N, rows_pad, _LANE)
    s2 = s_flat.reshape(rows_pad, _LANE)

    out = pl.pallas_call(
        _feature_noise_kernel,
        out_shape=jax.ShapeDtypeStruct((N, rows_pad, _LANE), x.dtype),
        # Tile axis OUTER, batch INNER -> scale block index ignores b, so the
        # scale stays VMEM-resident across the whole batch sweep.
        grid=(n_tiles, N // Bt),
        in_specs=[
            pl.BlockSpec((tile_rows, _LANE), lambda t, b: (t, 0)),
            pl.BlockSpec((Bt, tile_rows, _LANE), lambda t, b: (b, t, 0)),
        ],
        out_specs=pl.BlockSpec((Bt, tile_rows, _LANE), lambda t, b: (b, t, 0)),
        compiler_params=pltpu.CompilerParams(
            dimension_semantics=("parallel", "parallel"),
        ),
    )(s2, x3)

    out = out.reshape(N, L_pad)
    if L_pad != L:
        out = out[:, :L]
    return out.reshape(x.shape)


def feature_noise(x, key, uniform_range=UNIFORM_RANGE):
    """FeatureNoise forward: out = x * noise + x, noise ~ U(-r, r) over x.shape[1:]."""
    # TODO(synk): noise is sampled with jax.random in the wrapper because
    # pltpu.prng_* has no CPU/interpret lowering and would redraw the identical
    # slab on every grid step; the kernel fuses the broadcast multiply-add.
    scale = 1.0 + jax.random.uniform(
        key, x.shape[1:], dtype=jnp.float32,
        minval=-uniform_range, maxval=uniform_range,
    )
    return _apply_feature_scale(x, scale)


if __name__ == "__main__":
    key = jax.random.PRNGKey(0)
    kx, kn, kx2, kn2, kx3 = jax.random.split(key, 5)
    r = UNIFORM_RANGE

    # UNet-style feature map: (N, C, H, W) = (2, 4, 16, 16).
    x = jax.random.normal(kx, (2, 4, 16, 16), dtype=jnp.float32)
    scale = 1.0 + jax.random.uniform(
        kn, x.shape[1:], dtype=jnp.float32, minval=-r, maxval=r
    )

    out = jax.block_until_ready(_apply_feature_scale(x, scale))
    assert out.shape == x.shape and out.dtype == x.dtype
    ref = x * scale[None]  # == x * noise + x, noise broadcast over batch
    assert bool(jnp.allclose(out, ref, atol=1e-6, rtol=1e-6))
    assert bool(jnp.all(jnp.abs(scale - 1.0) <= r + 1e-6))

    # Combined wrapper (same key -> identical noise -> identical result).
    out2 = jax.block_until_ready(feature_noise(x, kn, r))
    assert bool(jnp.allclose(out2, ref, atol=1e-6, rtol=1e-6))

    # Padding fallback: feature size not a multiple of 128.
    xb = jax.random.normal(kx2, (2, 3, 5, 7), dtype=jnp.float32)
    sb = 1.0 + jax.random.uniform(
        kn2, xb.shape[1:], dtype=jnp.float32, minval=-r, maxval=r
    )
    outb = jax.block_until_ready(_apply_feature_scale(xb, sb))
    assert bool(jnp.allclose(outb, xb * sb[None], atol=1e-6, rtol=1e-6))

    # bf16 path: scale cast to x.dtype, dtype-aware sublane rounding.
    xh = jax.random.normal(kx3, (4, 4, 16, 16), dtype=jnp.bfloat16)
    outh = jax.block_until_ready(_apply_feature_scale(xh, scale))
    refh = xh * scale.astype(jnp.bfloat16)[None]
    assert outh.shape == xh.shape and outh.dtype == jnp.bfloat16
    assert bool(jnp.allclose(outh.astype(jnp.float32), refh.astype(jnp.float32),
                             atol=1e-2, rtol=1e-2))

    print("KERNEL_OK")
</pallas_src>

<mosaic_0001>
module attributes {stable_mosaic.version = 11 : i64} {
  func.func @_feature_noise_kernel(%arg0: i32, %arg1: i32, %arg2: memref<8x128xf32, #tpu.memory_space<vmem>>, %arg3: memref<2x8x128xf32, #tpu.memory_space<vmem>>, %arg4: memref<2x8x128xf32, #tpu.memory_space<vmem>>) attributes {dimension_semantics = [#tpu.dimension_semantics<parallel>, #tpu.dimension_semantics<parallel>], iteration_bounds = array<i64: 1, 1>, scalar_prefetch = 0 : i64, scratch_operands = 0 : i64, tpu.core_type = #tpu.core_type<tc>, window_params = [{transform_indices = @transform_0, window_bounds = array<i64: 8, 128>}, {transform_indices = @transform_1, window_bounds = array<i64: 2, 8, 128>}, {transform_indices = @transform_2, window_bounds = array<i64: 2, 8, 128>}]} {
    %c0 = arith.constant 0 : index
    %c0_0 = arith.constant 0 : index
    %c0_1 = arith.constant 0 : index
    %0 = vector.load %arg3[%c0, %c0_0, %c0_1] : memref<2x8x128xf32, #tpu.memory_space<vmem>>, vector<2x8x128xf32>
    %c0_2 = arith.constant 0 : index
    %c0_3 = arith.constant 0 : index
    %1 = vector.load %arg2[%c0_2, %c0_3] : memref<8x128xf32, #tpu.memory_space<vmem>>, vector<8x128xf32>
    %2 = vector.shape_cast %1 : vector<8x128xf32> to vector<1x8x128xf32>
    %3 = vector.broadcast %2 : vector<1x8x128xf32> to vector<2x8x128xf32>
    %4 = arith.mulf %0, %3 : vector<2x8x128xf32>
    %c0_4 = arith.constant 0 : index
    %c0_5 = arith.constant 0 : index
    %c0_6 = arith.constant 0 : index
    %5 = vector.load %arg4[%c0_4, %c0_5, %c0_6] : memref<2x8x128xf32, #tpu.memory_space<vmem>>, vector<2x8x128xf32>
    tpu.vector_store %arg4[%c0_4, %c0_5, %c0_6], %4 {strides = array<i32>} : memref<2x8x128xf32, #tpu.memory_space<vmem>>, vector<2x8x128xf32>,
    return
  }
  func.func @transform_0(%arg0: i32, %arg1: i32) -> (i32, i32) {
    %c0_i32 = arith.constant 0 : i32
    %c0_i32_0 = arith.constant 0 : i32
    return %arg0, %c0_i32 : i32, i32
  }
  func.func @transform_1(%arg0: i32, %arg1: i32) -> (i32, i32, i32) {
    %c0_i32 = arith.constant 0 : i32
    %c0_i32_0 = arith.constant 0 : i32
    return %arg1, %arg0, %c0_i32 : i32, i32, i32
  }
  func.func @transform_2(%arg0: i32, %arg1: i32) -> (i32, i32, i32) {
    %c0_i32 = arith.constant 0 : i32
    %c0_i32_0 = arith.constant 0 : i32
    return %arg1, %arg0, %c0_i32 : i32, i32, i32
  }
}

</mosaic_0001>

<llo_original>
// kernel: tpu_custom_call.1
$region0: #{tpu_custom_call.1}
  #allocation0 [shape = 'u32[]', space=smem, size = 0x4, offset = 0x4, fixed_abs, tag = 'smem constant byte address 0x4 - core index']
  #allocation1 [shape = 'u32[144,128]{1,0:T(1,128)}', space=vmem, size = 0x12000, scoped, tag = 'internal scratch']
  %s0 = inlined_call_operand.hbm [shape: f32[8,128], index: 0, kind: input, shape index: {}]
  %s1 = inlined_call_operand.hbm [shape: f32[2,8,128], index: 1, kind: input, shape index: {}]
  %s2 = inlined_call_operand.hbm [shape: f32[2,8,128], index: 2, kind: output, shape index: {}]
  %s3 = sld [smem:[#allocation0]]
  $region26: #{tpu_custom_call.1} parent=0
    _
  %s5 = ssub.s32 1, %s3
  %s6 = scalar_select 0, %s5, %s3
  $region1: #{tpu_custom_call.1} parent=0
    #allocation2 [shape = 'u8[4096]{0}', space=vmem, size = 0x1000, scoped, tag = 'input window, operand 0, single buffered']
    #allocation3 [shape = 's32[1]{0}', space=sflag, size = 0x4, scoped, tag = 'scoped memory for tpu_custom_call.1']
    #allocation4 [shape = 's32[1]{0}', space=sflag, size = 0x4, scoped, tag = 'scoped memory for tpu_custom_call.1']
    #allocation5 [shape = 'u8[8192]{0}', space=vmem, size = 0x2000, scoped, tag = 'input window, operand 1, single buffered']
    #allocation6 [shape = 's32[1]{0}', space=sflag, size = 0x4, scoped, tag = 'scoped memory for tpu_custom_call.1']
    #allocation7 [shape = 'u8[8192]{0}', space=vmem, size = 0x2000, scoped, tag = 'output window, operand 0, single buffered']
    %7 = vsyncpa [#allocation3], 0
    %8 = vsyncpa [#allocation6], 0
    %9 = vsyncpa [#allocation4], 0
    // Predicated region
    $region2: #{tpu_custom_call.1} parent=1 // pred_check
      _
    $region3: #{tpu_custom_call.1} parent=1 // pred_check_branch
      %11 = sbr.rel (0) target = $region5
    $region4: #{tpu_custom_call.1} parent=1 // pred_region
      %s13 = ssub.s32 128, 128
      %14 = vsyncadd [#allocation3], %s13
      %s16 = sshll.u32 [#allocation2], 4
      %s17 = int_to_ptr.vmem [resolvable:$true] %s16
      %19 = dma.hbm_to_vmem [thread:$0]  %s0, 128, %s17, [#allocation3]
    $region5: #{tpu_custom_call.1} parent=1 // pred_fallthru
      _
    // Predicated region
    $region6: #{tpu_custom_call.1} parent=1 // pred_check
      _
    $region7: #{tpu_custom_call.1} parent=1 // pred_check_branch
      %21 = sbr.rel (0) target = $region9
    $region8: #{tpu_custom_call.1} parent=1 // pred_region
      %s23 = ssub.s32 256, 256
      %24 = vsyncadd [#allocation6], %s23
      %s25 = sshll.u32 [#allocation5], 4
      %s26 = int_to_ptr.vmem [resolvable:$true] %s25
      %31 = dma.hbm_to_vmem [thread:$0]  %s1, 256, %s26, [#allocation6], 128, 128, 8
    $region9: #{tpu_custom_call.1} parent=1 // pred_fallthru
      _
    // Predicated region
    $region10: #{tpu_custom_call.1} parent=1 // pred_check
      _
    $region11: #{tpu_custom_call.1} parent=1 // pred_check_branch
      %33 = sbr.rel (0) target = $region13
    $region12: #{tpu_custom_call.1} parent=1 // pred_region
      %34 = dma.done [#allocation3], 128
    $region13: #{tpu_custom_call.1} parent=1 // pred_fallthru
      _
    // Predicated region
    $region14: #{tpu_custom_call.1} parent=1 // pred_check
      _
    $region15: #{tpu_custom_call.1} parent=1 // pred_check_branch
      %36 = sbr.rel (0) target = $region17
    $region16: #{tpu_custom_call.1} parent=1 // pred_region
      %37 = dma.done [#allocation6], 256
    $region17: #{tpu_custom_call.1} parent=1 // pred_fallthru
      _
    %v38 = vld [vmem:[#allocation5] sm:$0xff]
    %v39 = vld [vmem:[#allocation5 + $0x8] sm:$0xff]
    %v40 = vld [vmem:[#allocation2] sm:$0xff]
    %v41 = vmul.f32 %v38, %v40
    %v42 = vmul.f32 %v39, %v40
    %43 = vst [vmem:[#allocation7] sm:$0xff] %v41
    %44 = vst [vmem:[#allocation7 + $0x8] sm:$0xff] %v42
    // Predicated region
    $region18: #{tpu_custom_call.1} parent=1 // pred_check
      _
    $region19: #{tpu_custom_call.1} parent=1 // pred_check_branch
      %46 = sbr.rel (0) target = $region21
    $region20: #{tpu_custom_call.1} parent=1 // pred_region
      %s48 = ssub.s32 256, 256
      %49 = vsyncadd [#allocation4], %s48
      %s50 = sshll.u32 [#allocation7], 4
      %s51 = int_to_ptr.vmem [resolvable:$true] %s50
      %56 = dma.vmem_to_hbm [thread:$0]  %s51, 256, %s2, [#allocation4], 128, 128, 8
    $region21: #{tpu_custom_call.1} parent=1 // pred_fallthru
      _
    // Predicated region
    $region22: #{tpu_custom_call.1} parent=1 // pred_check
      _
    $region23: #{tpu_custom_call.1} parent=1 // pred_check_branch
      %58 = sbr.rel (0) target = $region25
    $region24: #{tpu_custom_call.1} parent=1 // pred_region
      %59 = dma.done [#allocation4], 256
    $region25: #{tpu_custom_call.1} parent=1 // pred_fallthru
      _
    %60 = vsyncpa [#allocation3], 1
    %61 = vsyncpa [#allocation6], 1
    %62 = vsyncpa [#allocation4], 1

</llo_original>
